<compile_context>
chip_gen: v7x
topology: tpu7x:2x2x1
jax: 0.10.0
libtpu: 0.0.40
codegen_flags: <defaults>
</compile_context>

<pallas_src>
import functools

import jax
import jax.numpy as jnp
import numpy as np
from jax.experimental import pallas as pl
from jax.experimental.pallas import tpu as pltpu


# ---------------------------------------------------------------------------
# Hardware probing (generation-aware tiling / precision choices).
# ---------------------------------------------------------------------------
def _vmem_capacity_bytes():
    try:
        return int(pltpu.get_tpu_info().vmem_capacity_bytes)
    except Exception:
        return 64 * 1024 * 1024          # v7x per-core VMEM: conservative floor


def _bf16_exp_ok():
    """bf16 EUP exists on v6e/v7x; v5e (and older) keep the exp in f32."""
    try:
        kind = jax.devices()[0].device_kind.lower()
    except Exception:
        return False
    return ("v6" in kind) or ("v7" in kind)


def _pick_tiles(batch, seq, hdim, num_heads, vdim, n_pad, key_tile=None):
    """Batch-tile / key-tile / scoped-VMEM-limit selection.

    Per-step VMEM model (counts double-buffered I/O slabs, projection
    intermediates, live (S,tk) kernel-matrix values and per-head weights).
    """
    del num_heads  # per-head weights counted explicitly below
    vmem_cap = _vmem_capacity_bytes()

    if key_tile is None:
        key_tile = seq
        if seq > 512:
            for cand in (512, 384, 256, 128, 64):
                if seq % cand == 0:
                    key_tile = cand
                    break
            # TODO(synk): ragged sequences would need pl.BoundedSlice key tiles.

    budget = int(vmem_cap * 0.6)         # headroom for compiler scratch / spills

    def per_step_bytes(bt):
        rows = bt * seq
        x_io = 2 * rows * hdim * 2                      # bf16 x slab, x2 buffers
        out_io = 2 * rows * n_pad * 4                   # f32 out slab, x2 buffers
        scratch = rows * vdim * (4 + 2 + 4) + rows * 4  # qn + v + acc + c
        ktile = 3 * bt * seq * key_tile * 4             # Gram / exponent / K live
        proj = 2 * rows * vdim * 4                      # projection intermediates
        weights = 2 * (2 * hdim * vdim * 2 + vdim * n_pad * 2 + n_pad * 4)
        return x_io + out_io + scratch + ktile + proj + weights

    # >=2 steps on the 'parallel' batch axis keeps both v7x TensorCores busy;
    # on v5e/v6e the per-step overhead this adds is ~0.35us, and at production
    # batch sizes the VMEM budget dominates the choice anyway.
    bt = batch if batch < 2 else batch // 2
    while bt > 1 and (batch % bt or per_step_bytes(bt) > budget):
        bt -= 1
    vmem_limit = int(min(vmem_cap, max(2 * per_step_bytes(bt), 32 * 1024 * 1024)))
    return bt, key_tile, vmem_limit


# ---------------------------------------------------------------------------
# Host-side parameter preparation (fold ARD constants into the weights).
# ---------------------------------------------------------------------------
def _prepare_params(params, num_heads, vdim, hdim):
    """exp(-log_ls) folded into W_q columns, exp(log_sf) folded into W_v,
    W_O split into per-head row blocks and lane-padded to a multiple of 128.

    The ARD exponent then needs no per-head constants:
        K_ij = exp(qn_i.qn_j - 0.5|qn_i|^2 - 0.5|qn_j|^2)    (<= 0)
    """
    n_pad = ((hdim + 127) // 128) * 128

    # fc_qkv weight rows: head h -> rows [2V*h, 2V*h+V) are q, next V are v.
    w = params["w_qkv"].reshape(num_heads, 2, vdim, hdim)
    inv_ls = jnp.exp(-params["log_ls"])                      # (H, V)
    sf = jnp.exp(params["log_sf"])                           # (H, 1)
    wq_t = jnp.transpose(w[:, 0] * inv_ls[:, :, None], (0, 2, 1)).astype(jnp.bfloat16)
    wv_t = jnp.transpose(w[:, 1] * sf[:, :, None], (0, 2, 1)).astype(jnp.bfloat16)

    # W_O^T rows [h*V, (h+1)*V) are head h's contribution; pad the out dim.
    wo_t = jnp.transpose(params["w_o"], (1, 0)).reshape(num_heads, vdim, hdim)
    wo_t = jnp.pad(wo_t, ((0, 0), (0, 0), (0, n_pad - hdim))).astype(jnp.bfloat16)
    b_o = jnp.pad(params["b_o"].reshape(1, hdim).astype(jnp.float32),
                  ((0, 0), (0, n_pad - hdim)))
    return wq_t, wv_t, wo_t, b_o, n_pad


# ---------------------------------------------------------------------------
# Kernel.
# ---------------------------------------------------------------------------
def sgp_layer_kernel(x_ref, wq_ref, wv_ref, wo_ref, bo_ref, out_ref,
                     qn_s, c_s, v_s, acc_s, *,
                     key_tile, num_key_tiles, use_bf16_exp):
    """Grid = (batch tile [parallel], head [acc -> out], key tile [acc -> acc_s])."""
    h = pl.program_id(1)
    kt = pl.program_id(2)
    last_h = pl.num_programs(1) - 1
    last_kt = pl.num_programs(2) - 1

    # ---- first key tile of each (batch tile, head): project q / v once -----
    @pl.when(kt == 0)
    def _():
        x = x_ref[...]                                            # (Bt,S,hdim) bf16
        # ARD length-scales / signal variance are pre-folded into the weights;
        # bf16 MXU operands with f32 accumulation.
        qn = jnp.dot(x, wq_ref[0], preferred_element_type=jnp.float32)  # (Bt,S,V)
        v = jnp.dot(x, wv_ref[0], preferred_element_type=jnp.float32)
        qn_s[...] = qn
        v_s[...] = v.astype(v_s.dtype)
        c_s[...] = 0.5 * jnp.sum(qn * qn, axis=-1)                # (Bt,S) hoisted
        acc_s[...] = jnp.zeros_like(acc_s)

    # ---- first step of each batch tile: zero the output accumulator --------
    @pl.when(jnp.logical_and(h == 0, kt == 0))
    def _():
        out_ref[...] = jnp.zeros_like(out_ref)

    # ---- one key tile of K_qq, accumulated into the per-head mean ----------
    qn_q = qn_s[...]                                              # (Bt,S,V) f32
    c_q = c_s[...][:, :, None]                                    # (Bt,S,1)
    if num_key_tiles == 1:
        qn_k = qn_q                                               # keys == queries
        v_k = v_s[...]
    else:
        k0 = pl.multiple_of(kt * key_tile, key_tile)
        qn_k = qn_s[:, pl.ds(k0, key_tile), :]                    # (Bt,tk,V)
        v_k = v_s[:, pl.ds(k0, key_tile), :]                      # (Bt,tk,V) bf16
    c_k = 0.5 * jnp.sum(qn_k * qn_k, axis=-1)[:, None, :]         # (Bt,1,tk)

    # f32 Gram: the (g - c_i - c_j) fold is cancellation-sensitive, keep f32.
    g = jnp.einsum('bsd,btd->bst', qn_q, qn_k,
                   preferred_element_type=jnp.float32)            # (Bt,S,tk)
    e = g - c_q - c_k                                             # exponent <= 0
    if use_bf16_exp:
        k_qq = jnp.exp(e.astype(jnp.bfloat16))        # bf16 EUP exp (v6e/v7x)
    else:
        k_qq = jnp.exp(e).astype(jnp.bfloat16)        # f32 EUP exp (v5e-safe)
    acc_s[...] += jnp.einsum('bst,btd->bsd', k_qq, v_k,
                             preferred_element_type=jnp.float32)  # (Bt,S,V)

    # ---- last key tile: fold this head straight into the output via W_O ----
    @pl.when(kt == last_kt)
    def _():
        out_ref[...] += jnp.dot(acc_s[...].astype(jnp.bfloat16), wo_ref[0],
                                preferred_element_type=jnp.float32)

    # ---- very last step: bias (Dropout is identity in eval mode) -----------
    @pl.when(jnp.logical_and(h == last_h, kt == last_kt))
    def _():
        out_ref[...] += bo_ref[...]


# ---------------------------------------------------------------------------
# Wrapper.
# ---------------------------------------------------------------------------
def sgp_layer_forward(x, cur_k, params, *, num_heads, key_tile=None):
    """SGP_LAYER.forward for kernel_type='ard', flag_sgp=False.

    `cur_k` only feeds k_beta on the flag_sgp=True branch; unused here.
    Returns (samples, None) like the PyTorch module.
    """
    del cur_k
    B, S, hdim = x.shape
    H = num_heads
    V = hdim // H

    wq_t, wv_t, wo_t, b_o, n_pad = _prepare_params(params, H, V, hdim)
    bt, tk, vmem_limit = _pick_tiles(B, S, hdim, H, V, n_pad, key_tile)
    nb, nkt = B // bt, S // tk
    use_bf16_exp = _bf16_exp_ok()

    x_b = x.astype(jnp.bfloat16)          # halves x DMA; f32 accumulation in-kernel

    kernel = functools.partial(sgp_layer_kernel, key_tile=tk,
                               num_key_tiles=nkt, use_bf16_exp=use_bf16_exp)

    out = pl.pallas_call(
        kernel,
        out_shape=jax.ShapeDtypeStruct((B, S, n_pad), jnp.float32),
        grid_spec=pltpu.PrefetchScalarGridSpec(
            num_scalar_prefetch=0,
            grid=(nb, H, nkt),
            in_specs=[
                pl.BlockSpec((bt, S, hdim), lambda i, h, k: (i, 0, 0)),   # x tile
                pl.BlockSpec((1, hdim, V), lambda i, h, k: (h, 0, 0)),    # Wq^T head h
                pl.BlockSpec((1, hdim, V), lambda i, h, k: (h, 0, 0)),    # Wv^T head h
                pl.BlockSpec((1, V, n_pad), lambda i, h, k: (h, 0, 0)),   # W_O rows h
                pl.BlockSpec((1, n_pad), lambda i, h, k: (0, 0)),         # bias
            ],
            out_specs=pl.BlockSpec((bt, S, n_pad), lambda i, h, k: (i, 0, 0)),
            scratch_shapes=[
                pltpu.VMEM((bt, S, V), jnp.float32),     # qn (ARD-scaled q)
                pltpu.VMEM((bt, S), jnp.float32),        # 0.5*|qn|^2 per query row
                pltpu.VMEM((bt, S, V), jnp.bfloat16),    # v (sf-scaled)
                pltpu.VMEM((bt, S, V), jnp.float32),     # per-head K@v accumulator
            ],
        ),
        compiler_params=pltpu.CompilerParams(
            dimension_semantics=("parallel", "arbitrary", "arbitrary"),
            vmem_limit_bytes=vmem_limit),
    )(x_b, wq_t, wv_t, wo_t, b_o)

    samples = out[:, None, :, :hdim]                 # (B, 1, S, hdim)
    return samples, None


# ---------------------------------------------------------------------------
# Precision-matched pure-JAX reference (same folded weights / bf16-f32 choices).
# ---------------------------------------------------------------------------
def reference_forward(x, params, *, num_heads, use_bf16_exp=False):
    B, S, hdim = x.shape
    H, V = num_heads, hdim // num_heads
    wq_t, wv_t, wo_t, b_o, _ = _prepare_params(params, H, V, hdim)
    xb = x.astype(jnp.bfloat16)
    qn = jnp.einsum('bsh,nhv->bnsv', xb, wq_t, preferred_element_type=jnp.float32)
    v = jnp.einsum('bsh,nhv->bnsv', xb, wv_t,
                   preferred_element_type=jnp.float32).astype(jnp.bfloat16)
    c = 0.5 * jnp.sum(qn * qn, axis=-1)                             # (B,H,S)
    g = jnp.einsum('bnsd,bntd->bnst', qn, qn, preferred_element_type=jnp.float32)
    e = g - c[..., :, None] - c[..., None, :]
    k = jnp.exp(e.astype(jnp.bfloat16)) if use_bf16_exp else jnp.exp(e).astype(jnp.bfloat16)
    mean = jnp.einsum('bnst,bntd->bnsd', k, v, preferred_element_type=jnp.float32)
    out = jnp.einsum('bnsv,nvp->bsp', mean.astype(jnp.bfloat16), wo_t,
                     preferred_element_type=jnp.float32) + b_o
    return out[:, None, :, :hdim]                                   # (B,1,S,hdim)


if __name__ == "__main__":
    # Small shapes consistent with the module: hdim=32, num_heads=2 -> vdim=16,
    # max_len=8, batch=2, keys_len=4 (keys_len unused on this branch).
    B, S, hdim, num_heads, keys_len = 2, 8, 32, 2, 4
    vdim = hdim // num_heads

    key = jax.random.PRNGKey(0)
    k_x, k_ck, k_qkv, k_ls, k_wo, k_bo = jax.random.split(key, 6)

    x = jax.random.normal(k_x, (B, S, hdim), dtype=jnp.float32)
    # cur_k shape implied by W_qk.view(H,1,1,vdim,hdim) @ cur_k.unsqueeze(-1):
    cur_k = jax.random.normal(k_ck, (num_heads, 1, keys_len, hdim),
                              dtype=jnp.float32)

    params = {
        # fc_qkv: Linear(hdim, 2*num_heads*vdim, bias=False)
        "w_qkv": 0.1 * jax.random.normal(k_qkv, (2 * num_heads * vdim, hdim),
                                         dtype=jnp.float32),
        # 'ard' init: log_sf = 0 (zeros); log_ls ~ N(0, 1)
        "log_ls": jax.random.normal(k_ls, (num_heads, vdim), dtype=jnp.float32),
        "log_sf": jnp.zeros((num_heads, 1), dtype=jnp.float32),
        # W_O: Linear(hdim, hdim) weight + bias (Dropout identity in eval)
        "w_o": 0.1 * jax.random.normal(k_wo, (hdim, hdim), dtype=jnp.float32),
        "b_o": 0.01 * jax.random.normal(k_bo, (1, hdim), dtype=jnp.float32),
    }

    samples, kl = sgp_layer_forward(x, cur_k, params, num_heads=num_heads)
    samples = jax.block_until_ready(samples)

    assert samples.shape == (B, 1, S, hdim)
    assert kl is None

    ref = reference_forward(x, params, num_heads=num_heads,
                            use_bf16_exp=_bf16_exp_ok())
    np.testing.assert_allclose(np.asarray(samples), np.asarray(ref),
                               rtol=1e-2, atol=1e-2)
    print("KERNEL_OK")
</pallas_src>

<mosaic_0001>
module attributes {stable_mosaic.version = 11 : i64} {
  func.func @sgp_layer_kernel(%arg0: i32, %arg1: i32, %arg2: i32, %arg3: memref<1x8x32xbf16, #tpu.memory_space<vmem>>, %arg4: memref<1x32x16xbf16, #tpu.memory_space<vmem>>, %arg5: memref<1x32x16xbf16, #tpu.memory_space<vmem>>, %arg6: memref<1x16x128xbf16, #tpu.memory_space<vmem>>, %arg7: memref<1x128xf32, #tpu.memory_space<vmem>>, %arg8: memref<1x8x128xf32, #tpu.memory_space<vmem>>, %arg9: memref<1x8x16xf32, #tpu.memory_space<vmem>>, %arg10: memref<1x8xf32, #tpu.memory_space<vmem>>, %arg11: memref<1x8x16xbf16, #tpu.memory_space<vmem>>, %arg12: memref<1x8x16xf32, #tpu.memory_space<vmem>>) attributes {dimension_semantics = [#tpu.dimension_semantics<parallel>, #tpu.dimension_semantics<arbitrary>, #tpu.dimension_semantics<arbitrary>], iteration_bounds = array<i64: 2, 2, 1>, scalar_prefetch = 0 : i64, scratch_operands = 4 : i64, tpu.core_type = #tpu.core_type<tc>, window_params = [{transform_indices = @transform_0, window_bounds = array<i64: 1, 8, 32>}, {transform_indices = @transform_1, window_bounds = array<i64: 1, 32, 16>}, {transform_indices = @transform_2, window_bounds = array<i64: 1, 32, 16>}, {transform_indices = @transform_3, window_bounds = array<i64: 1, 16, 128>}, {pipeline_mode = #tpu.pipeline_mode<synchronous>, transform_indices = @transform_4, window_bounds = array<i64: 1, 128>}, {transform_indices = @transform_5, window_bounds = array<i64: 1, 8, 128>}]} {
    %c0_i32 = arith.constant 0 : i32
    %0 = arith.cmpi eq, %arg2, %c0_i32 : i32
    %1 = arith.extui %0 : i1 to i32
    %c0_i32_0 = arith.constant 0 : i32
    %2 = arith.cmpi ne, %1, %c0_i32_0 : i32
    scf.if %2 {
      %c0_24 = arith.constant 0 : index
      %c0_25 = arith.constant 0 : index
      %c0_26 = arith.constant 0 : index
      %36 = vector.load %arg3[%c0_24, %c0_25, %c0_26] : memref<1x8x32xbf16, #tpu.memory_space<vmem>>, vector<1x8x32xbf16>
      %c0_27 = arith.constant 0 : index
      %c0_28 = arith.constant 0 : index
      %c0_29 = arith.constant 0 : index
      %37 = vector.load %arg4[%c0_27, %c0_28, %c0_29] : memref<1x32x16xbf16, #tpu.memory_space<vmem>>, vector<1x32x16xbf16>
      %38 = vector.shape_cast %37 : vector<1x32x16xbf16> to vector<32x16xbf16>
      %cst_30 = arith.constant dense<0.000000e+00> : vector<1x8x16xf32>
      %39 = tpu.matmul %36, %38, %cst_30 {dimension_numbers = #tpu.dot_dimension_numbers<[2], [0], [0, 1], [1], [0, 0, 0, 1, 1, 1], [], []>} : vector<1x8x32xbf16>, vector<32x16xbf16>, vector<1x8x16xf32> -> vector<1x8x16xf32>
      %c0_31 = arith.constant 0 : index
      %c0_32 = arith.constant 0 : index
      %c0_33 = arith.constant 0 : index
      %40 = vector.load %arg5[%c0_31, %c0_32, %c0_33] : memref<1x32x16xbf16, #tpu.memory_space<vmem>>, vector<1x32x16xbf16>
      %41 = vector.shape_cast %40 : vector<1x32x16xbf16> to vector<32x16xbf16>
      %cst_34 = arith.constant dense<0.000000e+00> : vector<1x8x16xf32>
      %42 = tpu.matmul %36, %41, %cst_34 {dimension_numbers = #tpu.dot_dimension_numbers<[2], [0], [0, 1], [1], [0, 0, 0, 1, 1, 1], [], []>} : vector<1x8x32xbf16>, vector<32x16xbf16>, vector<1x8x16xf32> -> vector<1x8x16xf32>
      %c0_35 = arith.constant 0 : index
      %c0_36 = arith.constant 0 : index
      %c0_37 = arith.constant 0 : index
      %43 = vector.load %arg9[%c0_35, %c0_36, %c0_37] : memref<1x8x16xf32, #tpu.memory_space<vmem>>, vector<1x8x16xf32>
      tpu.vector_store %arg9[%c0_35, %c0_36, %c0_37], %39 {strides = array<i32>} : memref<1x8x16xf32, #tpu.memory_space<vmem>>, vector<1x8x16xf32>,
      %44 = arith.truncf %42 : vector<1x8x16xf32> to vector<1x8x16xbf16>
      %c0_38 = arith.constant 0 : index
      %c0_39 = arith.constant 0 : index
      %c0_40 = arith.constant 0 : index
      %45 = vector.load %arg11[%c0_38, %c0_39, %c0_40] : memref<1x8x16xbf16, #tpu.memory_space<vmem>>, vector<1x8x16xbf16>
      tpu.vector_store %arg11[%c0_38, %c0_39, %c0_40], %44 {strides = array<i32>} : memref<1x8x16xbf16, #tpu.memory_space<vmem>>, vector<1x8x16xbf16>,
      %46 = arith.mulf %39, %39 : vector<1x8x16xf32>
      %cst_41 = arith.constant dense<0.000000e+00> : vector<1x8xf32>
      %47 = vector.multi_reduction <add>, %46, %cst_41 [2] : vector<1x8x16xf32> to vector<1x8xf32>
      %cst_42 = arith.constant 5.000000e-01 : f32
      %48 = vector.broadcast %cst_42 : f32 to vector<1x8xf32>
      %49 = arith.mulf %48, %47 : vector<1x8xf32>
      %c0_43 = arith.constant 0 : index
      %c0_44 = arith.constant 0 : index
      %50 = vector.load %arg10[%c0_43, %c0_44] : memref<1x8xf32, #tpu.memory_space<vmem>>, vector<1x8xf32>
      tpu.vector_store %arg10[%c0_43, %c0_44], %49 {strides = array<i32>} : memref<1x8xf32, #tpu.memory_space<vmem>>, vector<1x8xf32>,
      %cst_45 = arith.constant 0.000000e+00 : f32
      %51 = vector.broadcast %cst_45 : f32 to vector<1x8x16xf32>
      %c0_46 = arith.constant 0 : index
      %c0_47 = arith.constant 0 : index
      %c0_48 = arith.constant 0 : index
      %52 = vector.load %arg12[%c0_46, %c0_47, %c0_48] : memref<1x8x16xf32, #tpu.memory_space<vmem>>, vector<1x8x16xf32>
      tpu.vector_store %arg12[%c0_46, %c0_47, %c0_48], %51 {strides = array<i32>} : memref<1x8x16xf32, #tpu.memory_space<vmem>>, vector<1x8x16xf32>,
    } else {
    }
    %c0_i32_1 = arith.constant 0 : i32
    %3 = arith.cmpi eq, %arg1, %c0_i32_1 : i32
    %c0_i32_2 = arith.constant 0 : i32
    %4 = arith.cmpi eq, %arg2, %c0_i32_2 : i32
    %5 = arith.andi %3, %4 : i1
    %6 = arith.extui %5 : i1 to i32
    %c0_i32_3 = arith.constant 0 : i32
    %7 = arith.cmpi ne, %6, %c0_i32_3 : i32
    scf.if %7 {
      %cst_24 = arith.constant 0.000000e+00 : f32
      %36 = vector.broadcast %cst_24 : f32 to vector<1x8x128xf32>
      %c0_25 = arith.constant 0 : index
      %c0_26 = arith.constant 0 : index
      %c0_27 = arith.constant 0 : index
      %37 = vector.load %arg8[%c0_25, %c0_26, %c0_27] : memref<1x8x128xf32, #tpu.memory_space<vmem>>, vector<1x8x128xf32>
      tpu.vector_store %arg8[%c0_25, %c0_26, %c0_27], %36 {strides = array<i32>} : memref<1x8x128xf32, #tpu.memory_space<vmem>>, vector<1x8x128xf32>,
    } else {
    }
    %c0 = arith.constant 0 : index
    %c0_4 = arith.constant 0 : index
    %c0_5 = arith.constant 0 : index
    %8 = vector.load %arg9[%c0, %c0_4, %c0_5] : memref<1x8x16xf32, #tpu.memory_space<vmem>>, vector<1x8x16xf32>
    %c0_6 = arith.constant 0 : index
    %c0_7 = arith.constant 0 : index
    %9 = vector.load %arg10[%c0_6, %c0_7] : memref<1x8xf32, #tpu.memory_space<vmem>>, vector<1x8xf32>
    %10 = vector.shape_cast %9 : vector<1x8xf32> to vector<1x8x1xf32>
    %c0_8 = arith.constant 0 : index
    %c0_9 = arith.constant 0 : index
    %c0_10 = arith.constant 0 : index
    %11 = vector.load %arg11[%c0_8, %c0_9, %c0_10] : memref<1x8x16xbf16, #tpu.memory_space<vmem>>, vector<1x8x16xbf16>
    %12 = arith.mulf %8, %8 : vector<1x8x16xf32>
    %cst = arith.constant dense<0.000000e+00> : vector<1x8xf32>
    %13 = vector.multi_reduction <add>, %12, %cst [2] : vector<1x8x16xf32> to vector<1x8xf32>
    %14 = vector.shape_cast %13 : vector<1x8xf32> to vector<1x1x8xf32>
    %cst_11 = arith.constant 5.000000e-01 : f32
    %15 = vector.broadcast %cst_11 : f32 to vector<1x1x8xf32>
    %16 = arith.mulf %15, %14 : vector<1x1x8xf32>
    "tpu.trace_start"() <{level = 10 : i32, message = "bsd,btd->bst"}> : () -> ()
    %cst_12 = arith.constant dense<0.000000e+00> : vector<1x8x8xf32>
    %17 = tpu.matmul %8, %8, %cst_12 {dimension_numbers = #tpu.dot_dimension_numbers<[2], [2], [1], [1], [0, 0, 0, 1, 1, 1], [0], [0]>} : vector<1x8x16xf32>, vector<1x8x16xf32>, vector<1x8x8xf32> -> vector<1x8x8xf32>
    "tpu.trace_stop"() : () -> ()
    %18 = vector.broadcast %10 : vector<1x8x1xf32> to vector<1x8x8xf32>
    %19 = arith.subf %17, %18 : vector<1x8x8xf32>
    %20 = vector.broadcast %16 : vector<1x1x8xf32> to vector<1x8x8xf32>
    %21 = arith.subf %19, %20 : vector<1x8x8xf32>
    %22 = math.exp %21 : vector<1x8x8xf32>
    %23 = arith.truncf %22 : vector<1x8x8xf32> to vector<1x8x8xbf16>
    %c0_13 = arith.constant 0 : index
    %c0_14 = arith.constant 0 : index
    %c0_15 = arith.constant 0 : index
    %24 = vector.load %arg12[%c0_13, %c0_14, %c0_15] : memref<1x8x16xf32, #tpu.memory_space<vmem>>, vector<1x8x16xf32>
    "tpu.trace_start"() <{level = 10 : i32, message = "bst,btd->bsd"}> : () -> ()
    %cst_16 = arith.constant dense<0.000000e+00> : vector<1x8x16xf32>
    %25 = tpu.matmul %23, %11, %cst_16 {dimension_numbers = #tpu.dot_dimension_numbers<[2], [1], [1], [2], [0, 0, 0, 1, 1, 2], [0], [0]>} : vector<1x8x8xbf16>, vector<1x8x16xbf16>, vector<1x8x16xf32> -> vector<1x8x16xf32>
    "tpu.trace_stop"() : () -> ()
    %26 = arith.addf %24, %25 : vector<1x8x16xf32>
    %c0_17 = arith.constant 0 : index
    %c0_18 = arith.constant 0 : index
    %c0_19 = arith.constant 0 : index
    %27 = vector.load %arg12[%c0_17, %c0_18, %c0_19] : memref<1x8x16xf32, #tpu.memory_space<vmem>>, vector<1x8x16xf32>
    tpu.vector_store %arg12[%c0_17, %c0_18, %c0_19], %26 {strides = array<i32>} : memref<1x8x16xf32, #tpu.memory_space<vmem>>, vector<1x8x16xf32>,
    %c0_i32_20 = arith.constant 0 : i32
    %28 = arith.cmpi eq, %arg2, %c0_i32_20 : i32
    %29 = arith.extui %28 : i1 to i32
    %c0_i32_21 = arith.constant 0 : i32
    %30 = arith.cmpi ne, %29, %c0_i32_21 : i32
    scf.if %30 {
      %c0_24 = arith.constant 0 : index
      %c0_25 = arith.constant 0 : index
      %c0_26 = arith.constant 0 : index
      %36 = vector.load %arg8[%c0_24, %c0_25, %c0_26] : memref<1x8x128xf32, #tpu.memory_space<vmem>>, vector<1x8x128xf32>
      %c0_27 = arith.constant 0 : index
      %c0_28 = arith.constant 0 : index
      %c0_29 = arith.constant 0 : index
      %37 = vector.load %arg12[%c0_27, %c0_28, %c0_29] : memref<1x8x16xf32, #tpu.memory_space<vmem>>, vector<1x8x16xf32>
      %38 = arith.truncf %37 : vector<1x8x16xf32> to vector<1x8x16xbf16>
      %c0_30 = arith.constant 0 : index
      %c0_31 = arith.constant 0 : index
      %c0_32 = arith.constant 0 : index
      %39 = vector.load %arg6[%c0_30, %c0_31, %c0_32] : memref<1x16x128xbf16, #tpu.memory_space<vmem>>, vector<1x16x128xbf16>
      %40 = vector.shape_cast %39 : vector<1x16x128xbf16> to vector<16x128xbf16>
      %cst_33 = arith.constant dense<0.000000e+00> : vector<1x8x128xf32>
      %41 = tpu.matmul %38, %40, %cst_33 {dimension_numbers = #tpu.dot_dimension_numbers<[2], [0], [0, 1], [1], [0, 0, 0, 1, 1, 1], [], []>} : vector<1x8x16xbf16>, vector<16x128xbf16>, vector<1x8x128xf32> -> vector<1x8x128xf32>
      %42 = arith.addf %36, %41 : vector<1x8x128xf32>
      %c0_34 = arith.constant 0 : index
      %c0_35 = arith.constant 0 : index
      %c0_36 = arith.constant 0 : index
      %43 = vector.load %arg8[%c0_34, %c0_35, %c0_36] : memref<1x8x128xf32, #tpu.memory_space<vmem>>, vector<1x8x128xf32>
      tpu.vector_store %arg8[%c0_34, %c0_35, %c0_36], %42 {strides = array<i32>} : memref<1x8x128xf32, #tpu.memory_space<vmem>>, vector<1x8x128xf32>,
    } else {
    }
    %c1_i32 = arith.constant 1 : i32
    %31 = arith.cmpi eq, %arg1, %c1_i32 : i32
    %c0_i32_22 = arith.constant 0 : i32
    %32 = arith.cmpi eq, %arg2, %c0_i32_22 : i32
    %33 = arith.andi %31, %32 : i1
    %34 = arith.extui %33 : i1 to i32
    %c0_i32_23 = arith.constant 0 : i32
    %35 = arith.cmpi ne, %34, %c0_i32_23 : i32
    scf.if %35 {
      %c0_24 = arith.constant 0 : index
      %c0_25 = arith.constant 0 : index
      %c0_26 = arith.constant 0 : index
      %36 = vector.load %arg8[%c0_24, %c0_25, %c0_26] : memref<1x8x128xf32, #tpu.memory_space<vmem>>, vector<1x8x128xf32>
      %c0_27 = arith.constant 0 : index
      %c0_28 = arith.constant 0 : index
      %37 = vector.load %arg7[%c0_27, %c0_28] : memref<1x128xf32, #tpu.memory_space<vmem>>, vector<1x128xf32>
      %38 = vector.shape_cast %37 : vector<1x128xf32> to vector<1x1x128xf32>
      %39 = vector.broadcast %38 : vector<1x1x128xf32> to vector<1x8x128xf32>
      %40 = arith.addf %36, %39 : vector<1x8x128xf32>
      %c0_29 = arith.constant 0 : index
      %c0_30 = arith.constant 0 : index
      %c0_31 = arith.constant 0 : index
      %41 = vector.load %arg8[%c0_29, %c0_30, %c0_31] : memref<1x8x128xf32, #tpu.memory_space<vmem>>, vector<1x8x128xf32>
      tpu.vector_store %arg8[%c0_29, %c0_30, %c0_31], %40 {strides = array<i32>} : memref<1x8x128xf32, #tpu.memory_space<vmem>>, vector<1x8x128xf32>,
    } else {
    }
    return
  }
  func.func @transform_0(%arg0: i32, %arg1: i32, %arg2: i32) -> (i32, i32, i32) {
    %c0_i32 = arith.constant 0 : i32
    %c0_i32_0 = arith.constant 0 : i32
    %c0_i32_1 = arith.constant 0 : i32
    return %arg0, %c0_i32, %c0_i32_0 : i32, i32, i32
  }
  func.func @transform_1(%arg0: i32, %arg1: i32, %arg2: i32) -> (i32, i32, i32) {
    %c0_i32 = arith.constant 0 : i32
    %c0_i32_0 = arith.constant 0 : i32
    %c0_i32_1 = arith.constant 0 : i32
    return %arg1, %c0_i32, %c0_i32_0 : i32, i32, i32
  }
  func.func @transform_2(%arg0: i32, %arg1: i32, %arg2: i32) -> (i32, i32, i32) {
    %c0_i32 = arith.constant 0 : i32
    %c0_i32_0 = arith.constant 0 : i32
    %c0_i32_1 = arith.constant 0 : i32
    return %arg1, %c0_i32, %c0_i32_0 : i32, i32, i32
  }
  func.func @transform_3(%arg0: i32, %arg1: i32, %arg2: i32) -> (i32, i32, i32) {
    %c0_i32 = arith.constant 0 : i32
    %c0_i32_0 = arith.constant 0 : i32
    %c0_i32_1 = arith.constant 0 : i32
    return %arg1, %c0_i32, %c0_i32_0 : i32, i32, i32
  }
  func.func @transform_4(%arg0: i32, %arg1: i32, %arg2: i32) -> (i32, i32) {
    %c0_i32 = arith.constant 0 : i32
    %c0_i32_0 = arith.constant 0 : i32
    %c0_i32_1 = arith.constant 0 : i32
    return %c0_i32, %c0_i32_0 : i32, i32
  }
  func.func @transform_5(%arg0: i32, %arg1: i32, %arg2: i32) -> (i32, i32, i32) {
    %c0_i32 = arith.constant 0 : i32
    %c0_i32_0 = arith.constant 0 : i32
    %c0_i32_1 = arith.constant 0 : i32
    return %arg0, %c0_i32, %c0_i32_0 : i32, i32, i32
  }
}

</mosaic_0001>

<llo_original>
// kernel: tpu_custom_call.1
$region0: #{tpu_custom_call.1}
  #allocation0 [shape = 'u32[]', space=smem, size = 0x4, offset = 0x4, fixed_abs, tag = 'smem constant byte address 0x4 - core index']
  #allocation1 [shape = 'u32[144,128]{1,0:T(1,128)}', space=vmem, size = 0x12000, scoped, tag = 'internal scratch']
  #allocation2 [shape = 'f32[1,8,16]{2,1,0:T(8,128)}', space=vmem, size = 0x1000, scoped, tag = 'scratch operand']
  #allocation3 [shape = 'f32[1,8]{1,0:T(1,128)}', space=vmem, size = 0x200, scoped, tag = 'scratch operand']
  #allocation4 [shape = 'bf16[1,8,16]{2,1,0:T(8,128)(2,1)}', space=vmem, size = 0x800, scoped, tag = 'scratch operand']
  #allocation5 [shape = 'f32[1,8,16]{2,1,0:T(8,128)}', space=vmem, size = 0x1000, scoped, tag = 'scratch operand']
  %s0 = inlined_call_operand.vmem [shape: bf16[2,8,32], index: 0, kind: input, shape index: {}]
  %s1 = inlined_call_operand.vmem [shape: bf16[2,32,16], index: 1, kind: input, shape index: {}]
  %s2 = inlined_call_operand.vmem [shape: bf16[2,32,16], index: 2, kind: input, shape index: {}]
  %s3 = inlined_call_operand.vmem [shape: bf16[2,16,128], index: 3, kind: input, shape index: {}]
  %s4 = inlined_call_operand.vmem [shape: f32[1,128], index: 4, kind: input, shape index: {}]
  %s5 = inlined_call_operand.hbm [shape: f32[2,8,128], index: 5, kind: output, shape index: {}]
  %s6 = sld [smem:[#allocation0]]
  $region69: #{tpu_custom_call.1} parent=0
    _
  %s8 = ssub.s32 1, %s6
  %s9 = scalar_select 0, %s8, %s6
  $region1: #{tpu_custom_call.1} parent=0
    #allocation6 [shape = 'u8[8192]{0}', space=vmem, size = 0x2000, scoped, tag = 'output window, operand 0']
    #allocation7 [shape = 's32[2]{0}', space=sflag, size = 0x8, scoped, tag = 'scoped memory for tpu_custom_call.1']
    %10 = vsyncpa [#allocation7], 0
    %s11 = scalar_lea.sflag [#allocation7], 1
    %12 = vsyncpa %s11, 0
    loop: start=0, step=1, limit=6
    $region2: #{tpu_custom_call.1} parent=1 // loop_pre_header
      _
    $region3: #{tpu_custom_call.1} parent=1 // loop_header
      %s14 = sphi 0, %s18
      %p15 = scmp.ge.s32.totalorder %s14, 6
      %s21 = sphi 0, %s40
      %s22 = sphi 0, %s36
      %s23 = sphi 0, %s32
      %s24 = sphi 0, %s21
      %s25 = sphi 0, %s22
      %s26 = sphi 0, %s23
      %s27 = sphi 0, %s24
      %s28 = sphi 0, %s25
      %s29 = sphi 0, %s26
      %s43 = sphi 0, %s45
      %s46 = sphi 0, %s43
      %s47 = sphi 0, %s46
      %s63 = sphi 0, %s47
      %s69 = sphi 0, %s71
      %s72 = sphi 0, %s69
      %s73 = sphi 0, %s72
      %s89 = sphi 0, %s73
      %s95 = sphi 0, %s97
      %s98 = sphi 0, %s95
      %s99 = sphi 0, %s98
      %s115 = sphi 0, %s99
      %s121 = sphi 0, %s123
      %s124 = sphi 0, %s121
      %s125 = sphi 0, %s124
      %s141 = sphi 0, %s125
      %s145 = sphi 0, %s145
      %s147 = sphi 0, %s145
      %s148 = sphi 0, %s147
      %s162 = sphi 0, %s148
      %s168 = sphi 0, %s170
      %s171 = sphi 0, %s168
      %s172 = sphi 0, %s171
      %s188 = sphi 0, %s172
    $region4: #{tpu_custom_call.1} parent=1 // loop_header_branch
      %17 = sbr.rel (%p15) target = $region8
    $region5: #{tpu_custom_call.1} parent=1 // loop_body
      %s19 = ssub.s32 %s14, 1
      %s20 = ssub.s32 %s14, 2
      %s30 = sadd.s32 1, %s23
      %p31 = scmp.ge.s32.totalorder %s30, 1
      %s32 = scalar_select %p31, 0, %s30
      %s33 = sadd.s32 1, %s22
      %s34 = scalar_select %p31, %s33, %s22
      %p35 = scmp.ge.s32.totalorder %s34, 2
      %s36 = scalar_select %p35, 0, %s34
      %s37 = sadd.s32 1, %s21
      %s38 = scalar_select %p35, %s37, %s21
      %p39 = scmp.ge.s32.totalorder %s38, 2
      %s40 = scalar_select %p39, 0, %s38
      %s41 = ssub.s32 %s21, %s40
      %p42 = scmp.eq.s32.totalorder %s41, 0
      %s44 = sadd.s32 %s43, 1
      %s45 = scalar_select %p42, %s43, %s44
      %p48 = pneg %p42
      %p49 = scmp.eq.s32.totalorder %s14, 3
      %p50 = por %p48, %p49
      %p51 = scmp.ne.s32.totalorder %s43, %s46
      %p52 = scmp.eq.s32.totalorder %s14, 0
      %p53 = por %p51, %p52
      %p54 = scmp.ne.s32.totalorder %s43, %s46
      %p55 = scmp.eq.s32.totalorder %s19, 3
      %p56 = por %p54, %p55
      %p57 = scmp.ne.s32.totalorder %s46, %s47
      %p58 = scmp.eq.s32.totalorder %s19, 0
      %p59 = por %p57, %p58
      %p60 = scmp.ne.s32.totalorder %s46, %s47
      %p61 = scmp.eq.s32.totalorder %s20, 3
      %p62 = por %p60, %p61
      %p64 = scmp.ne.s32.totalorder %s47, %s63
      %p65 = scmp.eq.s32.totalorder %s20, 0
      %p66 = por %p64, %p65
      %s67 = ssub.s32 %s22, %s36
      %p68 = scmp.eq.s32.totalorder %s67, 0
      %s70 = sadd.s32 %s69, 1
      %s71 = scalar_select %p68, %s69, %s70
      %p74 = pneg %p68
      %p75 = scmp.eq.s32.totalorder %s14, 3
      %p76 = por %p74, %p75
      %p77 = scmp.ne.s32.totalorder %s69, %s72
      %p78 = scmp.eq.s32.totalorder %s14, 0
      %p79 = por %p77, %p78
      %p80 = scmp.ne.s32.totalorder %s69, %s72
      %p81 = scmp.eq.s32.totalorder %s19, 3
      %p82 = por %p80, %p81
      %p83 = scmp.ne.s32.totalorder %s72, %s73
      %p84 = scmp.eq.s32.totalorder %s19, 0
      %p85 = por %p83, %p84
      %p86 = scmp.ne.s32.totalorder %s72, %s73
      %p87 = scmp.eq.s32.totalorder %s20, 3
      %p88 = por %p86, %p87
      %p90 = scmp.ne.s32.totalorder %s73, %s89
      %p91 = scmp.eq.s32.totalorder %s20, 0
      %p92 = por %p90, %p91
      %s93 = ssub.s32 %s22, %s36
      %p94 = scmp.eq.s32.totalorder %s93, 0
      %s96 = sadd.s32 %s95, 1
      %s97 = scalar_select %p94, %s95, %s96
      %p100 = pneg %p94
      %p101 = scmp.eq.s32.totalorder %s14, 3
      %p102 = por %p100, %p101
      %p103 = scmp.ne.s32.totalorder %s95, %s98
      %p104 = scmp.eq.s32.totalorder %s14, 0
      %p105 = por %p103, %p104
      %p106 = scmp.ne.s32.totalorder %s95, %s98
      %p107 = scmp.eq.s32.totalorder %s19, 3
      %p108 = por %p106, %p107
      %p109 = scmp.ne.s32.totalorder %s98, %s99
      %p110 = scmp.eq.s32.totalorder %s19, 0
      %p111 = por %p109, %p110
      %p112 = scmp.ne.s32.totalorder %s98, %s99
      %p113 = scmp.eq.s32.totalorder %s20, 3
      %p114 = por %p112, %p113
      %p116 = scmp.ne.s32.totalorder %s99, %s115
      %p117 = scmp.eq.s32.totalorder %s20, 0
      %p118 = por %p116, %p117
      %s119 = ssub.s32 %s22, %s36
      %p120 = scmp.eq.s32.totalorder %s119, 0
      %s122 = sadd.s32 %s121, 1
      %s123 = scalar_select %p120, %s121, %s122
      %p126 = pneg %p120
      %p127 = scmp.eq.s32.totalorder %s14, 3
      %p128 = por %p126, %p127
      %p129 = scmp.ne.s32.totalorder %s121, %s124
      %p130 = scmp.eq.s32.totalorder %s14, 0
      %p131 = por %p129, %p130
      %p132 = scmp.ne.s32.totalorder %s121, %s124
      %p133 = scmp.eq.s32.totalorder %s19, 3
      %p134 = por %p132, %p133
      %p135 = scmp.ne.s32.totalorder %s124, %s125
      %p136 = scmp.eq.s32.totalorder %s19, 0
      %p137 = por %p135, %p136
      %p138 = scmp.ne.s32.totalorder %s124, %s125
      %p139 = scmp.eq.s32.totalorder %s20, 3
      %p140 = por %p138, %p139
      %p142 = scmp.ne.s32.totalorder %s125, %s141
      %p143 = scmp.eq.s32.totalorder %s20, 0
      %p144 = por %p142, %p143
      %s146 = sadd.s32 %s145, 1
      %p149 = scmp.eq.s32.totalorder %s14, 3
      %p150 = scmp.ne.s32.totalorder %s145, %s147
      %p151 = scmp.eq.s32.totalorder %s14, 0
      %p152 = por %p150, %p151
      %p153 = scmp.ne.s32.totalorder %s145, %s147
      %p154 = scmp.eq.s32.totalorder %s19, 3
      %p155 = por %p153, %p154
      %p156 = scmp.ne.s32.totalorder %s147, %s148
      %p157 = scmp.eq.s32.totalorder %s19, 0
      %p158 = por %p156, %p157
      %p159 = scmp.ne.s32.totalorder %s147, %s148
      %p160 = scmp.eq.s32.totalorder %s20, 3
      %p161 = por %p159, %p160
      %p163 = scmp.ne.s32.totalorder %s148, %s162
      %p164 = scmp.eq.s32.totalorder %s20, 0
      %p165 = por %p163, %p164
      %s166 = ssub.s32 %s21, %s40
      %p167 = scmp.eq.s32.totalorder %s166, 0
      %s169 = sadd.s32 %s168, 1
      %s170 = scalar_select %p167, %s168, %s169
      %p173 = pneg %p167
      %p174 = scmp.eq.s32.totalorder %s14, 3
      %p175 = por %p173, %p174
      %p176 = scmp.ne.s32.totalorder %s168, %s171
      %p177 = scmp.eq.s32.totalorder %s14, 0
      %p178 = por %p176, %p177
      %p179 = scmp.ne.s32.totalorder %s168, %s171
      %p180 = scmp.eq.s32.totalorder %s19, 3
      %p181 = por %p179, %p180
      %p182 = scmp.ne.s32.totalorder %s171, %s172
      %p183 = scmp.eq.s32.totalorder %s19, 0
      %p184 = por %p182, %p183
      %p185 = scmp.ne.s32.totalorder %s171, %s172
      %p186 = scmp.eq.s32.totalorder %s20, 3
      %p187 = por %p185, %p186
      %p189 = scmp.ne.s32.totalorder %s172, %s188
      %p190 = scmp.eq.s32.totalorder %s20, 0
      %p191 = por %p189, %p190
      %p192 = scmp.le.s32.totalorder 1, %s14
      %p193 = scmp.lt.s32.totalorder %s14, 5
      %p194 = pnand %p192, %p193
      %p195 = pneg %p194
      // Predicated region
      $region9: #{tpu_custom_call.1} parent=5 // pred_check
        _
      $region10: #{tpu_custom_call.1} parent=5 // pred_check_branch
        %197 = sbr.rel (%p194) target = $region12
      $region11: #{tpu_custom_call.1} parent=5 // pred_region
        %s198 = ssub.s32 %s14, 1
        // Predicated region
        $region13: #{tpu_custom_call.1} parent=11 // pred_check
          %p199 = pneg %p158
        $region14: #{tpu_custom_call.1} parent=11 // pred_check_branch
          %201 = sbr.rel (%p199) target = $region16
        $region15: #{tpu_custom_call.1} parent=11 // pred_region
          _
        $region16: #{tpu_custom_call.1} parent=11 // pred_fallthru
          _
      $region12: #{tpu_custom_call.1} parent=5 // pred_fallthru
        _
      %p202 = scmp.lt.s32.totalorder %s14, 4
      // Predicated region
      $region17: #{tpu_custom_call.1} parent=5 // pred_check
        %p203 = pneg %p202
      $region18: #{tpu_custom_call.1} parent=5 // pred_check_branch
        %205 = sbr.rel (%p203) target = $region20
      $region19: #{tpu_custom_call.1} parent=5 // pred_region
        // Predicated region
        $region21: #{tpu_custom_call.1} parent=19 // pred_check
          %p206 = pneg %p53
        $region22: #{tpu_custom_call.1} parent=19 // pred_check_branch
          %208 = sbr.rel (%p206) target = $region24
        $region23: #{tpu_custom_call.1} parent=19 // pred_region
          %p209 = scmp.lt.s32.totalorder %s21, 1
          %s210 = scalar_select %p209, %s21, 1
          %s211 = smul.addr %s210, 4
          %s212 = scalar_lea.vmem %s0, %s211
        $region24: #{tpu_custom_call.1} parent=19 // pred_fallthru
          _
        // Predicated region
        $region25: #{tpu_custom_call.1} parent=19 // pred_check
          %p213 = pneg %p79
        $region26: #{tpu_custom_call.1} parent=19 // pred_check_branch
          %215 = sbr.rel (%p213) target = $region28
        $region27: #{tpu_custom_call.1} parent=19 // pred_region
          %p216 = scmp.lt.s32.totalorder %s22, 1
          %s217 = scalar_select %p216, %s22, 1
          %s218 = smul.addr %s217, 4
          %s219 = smul.addr %s218, 4
          %s220 = scalar_lea.vmem %s1, %s219
        $region28: #{tpu_custom_call.1} parent=19 // pred_fallthru
          _
        // Predicated region
        $region29: #{tpu_custom_call.1} parent=19 // pred_check
          %p221 = pneg %p105
        $region30: #{tpu_custom_call.1} parent=19 // pred_check_branch
          %223 = sbr.rel (%p221) target = $region32
        $region31: #{tpu_custom_call.1} parent=19 // pred_region
          %p224 = scmp.lt.s32.totalorder %s22, 1
          %s225 = scalar_select %p224, %s22, 1
          %s226 = smul.addr %s225, 4
          %s227 = smul.addr %s226, 4
          %s228 = scalar_lea.vmem %s2, %s227
        $region32: #{tpu_custom_call.1} parent=19 // pred_fallthru
          _
        // Predicated region
        $region33: #{tpu_custom_call.1} parent=19 // pred_check
          %p229 = pneg %p131
        $region34: #{tpu_custom_call.1} parent=19 // pred_check_branch
          %231 = sbr.rel (%p229) target = $region36
        $region35: #{tpu_custom_call.1} parent=19 // pred_region
          %p232 = scmp.lt.s32.totalorder %s22, 1
          %s233 = scalar_select %p232, %s22, 1
          %s234 = smul.addr %s233, 2
          %s235 = smul.addr %s234, 4
          %s236 = scalar_lea.vmem %s3, %s235
        $region36: #{tpu_custom_call.1} parent=19 // pred_fallthru
          _
      $region20: #{tpu_custom_call.1} parent=5 // pred_fallthru
        _
      %p237 = scmp.le.s32.totalorder 1, %s14
      %p238 = scmp.lt.s32.totalorder %s14, 5
      %p239 = pnand %p237, %p238
      %p240 = pneg %p239
      // Predicated region
      $region37: #{tpu_custom_call.1} parent=5 // pred_check
        _
      $region38: #{tpu_custom_call.1} parent=5 // pred_check_branch
        %242 = sbr.rel (%p239) target = $region40
      $region39: #{tpu_custom_call.1} parent=5 // pred_region
        %s243 = ssub.s32 %s14, 1
        %p244 = scmp.lt.s32.totalorder %s24, 1
        %s245 = scalar_select %p244, %s24, 1
        %s246 = smul.addr %s245, 4
        %s247 = scalar_lea.vmem %s0, %s246
        %p248 = pneg %p59
        %p249 = pneg %p56
        %p250 = scmp.lt.s32.totalorder %s25, 1
        %s251 = scalar_select %p250, %s25, 1
        %s252 = smul.addr %s251, 4
        %s253 = smul.addr %s252, 4
        %s254 = scalar_lea.vmem %s1, %s253
        %p255 = pneg %p85
        %p256 = pneg %p82
        %p257 = scmp.lt.s32.totalorder %s25, 1
        %s258 = scalar_select %p257, %s25, 1
        %s259 = smul.addr %s258, 4
        %s260 = smul.addr %s259, 4
        %s261 = scalar_lea.vmem %s2, %s260
        %p262 = pneg %p111
        %p263 = pneg %p108
        %p264 = scmp.lt.s32.totalorder %s25, 1
        %s265 = scalar_select %p264, %s25, 1
        %s266 = smul.addr %s265, 2
        %s267 = smul.addr %s266, 4
        %s268 = scalar_lea.vmem %s3, %s267
        %p269 = pneg %p137
        %p270 = pneg %p134
        %p271 = pneg %p158
        %p272 = pneg %p155
        %p273 = pneg %p184
        %p274 = pneg %p181
        %s275 = sand.u32 %s171, 1
        %s276 = scalar_lea.sflag [#allocation7], %s275
        %s277 = sand.u32 %s171, 1
        %s278 = smul.addr %s277, 8
        %s279 = scalar_lea.vmem [#allocation6], %s278
        %p280 = scmp.lt.s32.totalorder %s24, 1
        %s281 = scalar_select %p280, %s24, 1
        %s282 = smul.addr %s281, 4
        %s283 = scalar_lea.vmem %s0, %s282
        %p284 = scmp.lt.s32.totalorder %s25, 1
        %s285 = scalar_select %p284, %s25, 1
        %s286 = smul.addr %s285, 4
        %s287 = smul.addr %s286, 4
        %s288 = scalar_lea.vmem %s1, %s287
        %p289 = scmp.lt.s32.totalorder %s25, 1
        %s290 = scalar_select %p289, %s25, 1
        %s291 = smul.addr %s290, 4
        %s292 = smul.addr %s291, 4
        %s293 = scalar_lea.vmem %s2, %s292
        %p294 = scmp.lt.s32.totalorder %s25, 1
        %s295 = scalar_select %p294, %s25, 1
        %s296 = smul.addr %s295, 2
        %s297 = smul.addr %s296, 4
        %s298 = scalar_lea.vmem %s3, %s297
        %p300 = scmp.eq.s32.totalorder %s26, 0
        // Predicated region
        $region41: #{tpu_custom_call.1} parent=39 // pred_check
          %p301 = pneg %p300
        $region42: #{tpu_custom_call.1} parent=39 // pred_check_branch
          %303 = sbr.rel (%p301) target = $region44
        $region43: #{tpu_custom_call.1} parent=39 // pred_region
          %v304 = vld [vmem:[%s283] sm:$0xf]
          %v305 = vld [vmem:[%s288] sm:$0xf]
          %v306 = vld [vmem:[%s288 + $0x4] sm:$0xf]
          %v307 = vld [vmem:[%s288 + $0x8] sm:$0xf]
          %v308 = vld [vmem:[%s288 + $0xc] sm:$0xf]
          %v313 = vunpack.c.l.b16 %v305
          %v314 = vunpack.c.l.b16 %v306
          %v315 = vunpack.c.l.b16 %v307
          %v316 = vunpack.c.l.b16 %v308
          %v317 = vpack.c.b16 %v314, %v313
          %v318 = vpack.c.b16 %v316, %v315
          %vm321 = vcmask 261120
          %v323 = vsel %vm321, %v304, 0
          %325 = vmatprep.subr.bf16.mxu0 0
          %326 = vmatpush1.bf16.msra.mxu0 %v317
          %327 = vmatprep.subr.bf16.mxu0 0
          %328 = vmatpush1.bf16.msra.mxu0 %v318
          %329 = vmatprep.subr.bf16.mxu0 0
          %330 = vmatpush1.bf16.msra.mxu0 0
          %331 = vmatprep.subr.bf16.mxu0 0
          %332 = vmatpush1.bf16.msra.mxu0 0
          %333 = vmatprep.subr.bf16.mxu0 0
          %334 = vmatpush1.bf16.msra.mxu0 0
          %335 = vmatprep.subr.bf16.mxu0 0
          %336 = vmatpush1.bf16.msra.mxu0 0
          %337 = vmatprep.subr.bf16.mxu0 0
          %338 = vmatpush1.bf16.msra.mxu0 0
          %339 = vmatprep.subr.bf16.mxu0 0
          %340 = vmatpush1.bf16.msra.mxu0 0
          %341 = vmatprep.subr.bf16.mxu0 0
          %342 = vmatpush1.bf16.msra.mxu0 0
          %343 = vmatprep.subr.bf16.mxu0 0
          %344 = vmatpush1.bf16.msra.mxu0 0
          %345 = vmatprep.subr.bf16.mxu0 0
          %346 = vmatpush1.bf16.msra.mxu0 0
          %347 = vmatprep.subr.bf16.mxu0 0
          %348 = vmatpush1.bf16.msra.mxu0 0
          %349 = vmatprep.subr.bf16.mxu0 0
          %350 = vmatpush1.bf16.msra.mxu0 0
          %351 = vmatprep.subr.bf16.mxu0 0
          %352 = vmatpush1.bf16.msra.mxu0 0
          %353 = vmatprep.subr.bf16.mxu0 0
          %354 = vmatpush1.bf16.msra.mxu0 0
          %355 = vmatprep.subr.bf16.mxu0 0
          %356 = vmatpush1.bf16.msra.mxu0 0
          %357 = vmatprep.mubr.bf16.mxu0 0
          %358 = vmatmul.mubr.bf16.gmra.mrb[0].mxu0 %v323
          %v359 = vpop.f32.mrb[0].mxu0
          %v360 = vadd.f32 0.0, %v359
          %v361 = vpop.f32.mrb[0].mxu0
          %v362 = vpop.f32.mrb[0].mxu0
          %v363 = vpop.f32.mrb[0].mxu0
          %364 = vdwg.mxu0
          %v365 = vld [vmem:[%s293] sm:$0xf]
          %v366 = vld [vmem:[%s293 + $0x4] sm:$0xf]
          %v367 = vld [vmem:[%s293 + $0x8] sm:$0xf]
          %v368 = vld [vmem:[%s293 + $0xc] sm:$0xf]
          %v373 = vunpack.c.l.b16 %v365
          %v374 = vunpack.c.l.b16 %v366
          %v375 = vunpack.c.l.b16 %v367
          %v376 = vunpack.c.l.b16 %v368
          %v377 = vpack.c.b16 %v374, %v373
          %v378 = vpack.c.b16 %v376, %v375
          %381 = vmatprep.subr.bf16.mxu0 0
          %382 = vmatpush1.bf16.msra.mxu0 %v377
          %383 = vmatprep.subr.bf16.mxu0 0
          %384 = vmatpush1.bf16.msra.mxu0 %v378
          %385 = vmatprep.subr.bf16.mxu0 0
          %386 = vmatpush1.bf16.msra.mxu0 0
          %387 = vmatprep.subr.bf16.mxu0 0
          %388 = vmatpush1.bf16.msra.mxu0 0
          %389 = vmatprep.subr.bf16.mxu0 0
          %390 = vmatpush1.bf16.msra.mxu0 0
          %391 = vmatprep.subr.bf16.mxu0 0
          %392 = vmatpush1.bf16.msra.mxu0 0
          %393 = vmatprep.subr.bf16.mxu0 0
          %394 = vmatpush1.bf16.msra.mxu0 0
          %395 = vmatprep.subr.bf16.mxu0 0
          %396 = vmatpush1.bf16.msra.mxu0 0
          %397 = vmatprep.subr.bf16.mxu0 0
          %398 = vmatpush1.bf16.msra.mxu0 0
          %399 = vmatprep.subr.bf16.mxu0 0
          %400 = vmatpush1.bf16.msra.mxu0 0
          %401 = vmatprep.subr.bf16.mxu0 0
          %402 = vmatpush1.bf16.msra.mxu0 0
          %403 = vmatprep.subr.bf16.mxu0 0
          %404 = vmatpush1.bf16.msra.mxu0 0
          %405 = vmatprep.subr.bf16.mxu0 0
          %406 = vmatpush1.bf16.msra.mxu0 0
          %407 = vmatprep.subr.bf16.mxu0 0
          %408 = vmatpush1.bf16.msra.mxu0 0
          %409 = vmatprep.subr.bf16.mxu0 0
          %410 = vmatpush1.bf16.msra.mxu0 0
          %411 = vmatprep.subr.bf16.mxu0 0
          %412 = vmatpush1.bf16.msra.mxu0 0
          %413 = vmatprep.mubr.bf16.mxu0 0
          %414 = vmatmul.mubr.bf16.gmra.mrb[0].mxu0 %v323
          %v415 = vpop.f32.mrb[0].mxu0
          %v416 = vadd.f32 0.0, %v415
          %v417 = vpop.f32.mrb[0].mxu0
          %v418 = vpop.f32.mrb[0].mxu0
          %v419 = vpop.f32.mrb[0].mxu0
          %420 = vdwg.mxu0
          %vm421 = vcmask 130048
          %422 = vst.msk [vmem:[#allocation2] sm:$0xff] %vm421, %v360
          %v423 = vpack.c.bf16 %v416, %v416
          %vm424 = vcmask 125952
          %425 = vst.msk [vmem:[#allocation4] sm:$0xf] %vm424, %v423
          %v426 = vmul.f32 %v360, %v360
          %v427 = vsel %vm421, %v426, 0.0
          %428 = vadd.xlane.f32.xlu0 %v427
          %v429 = vpop.xlane.xlu0 %428
          %v430 = vmul.f32 %v429, 0.5
          %v432 = vlaneseq
          %v433 = vand.u32 %v432, 127
          %v434 = vlaneseq
          %v435 = vshrl.u32 %v434, 7
          %v436 = vsub.s32 %v433, %v435
          %v437 = vrot.slane %v430, %v436
          %vm439 = vcmask 57344
          %440 = vst.msk [vmem:[#allocation3] sm:$0x1] %vm439, %v437
          %441 = vst.msk [vmem:[#allocation5] sm:$0xff] %vm421, 0.0
        $region44: #{tpu_custom_call.1} parent=39 // pred_fallthru
          _
        %p442 = scmp.eq.s32.totalorder %s25, 0
        %p443 = pnand %p442, %p300
        %p444 = pneg %p443
        // Predicated region
        $region45: #{tpu_custom_call.1} parent=39 // pred_check
          _
        $region46: #{tpu_custom_call.1} parent=39 // pred_check_branch
          %446 = sbr.rel (%p443) target = $region48
        $region47: #{tpu_custom_call.1} parent=39 // pred_region
          %447 = vst [vmem:[%s279] sm:$0xff] 0.0
        $region48: #{tpu_custom_call.1} parent=39 // pred_fallthru
          _
        %v448 = vld [vmem:[#allocation2] sm:$0xff]
        %v449 = vld [vmem:[#allocation3] sm:$0x1]
        %v450 = vlaneseq
        %v451 = vshrl.u32 %v450, 7
        %v452 = vsub.s32 0, %v451
        %v453 = vrot.slane %v449, %v452
        %455 = vbcast.lane.b32.xlu0 %v453, 256
        %v456 = vpop.permute.xlu0 %455
        %v457 = vld [vmem:[#allocation4] sm:$0xf]
        %v458 = vmul.f32 %v448, %v448
        %vm459 = vcmask 130048
        %v460 = vsel %vm459, %v458, 0.0
        %461 = vadd.xlane.f32.xlu0 %v460
        %v462 = vpop.xlane.xlu0 %461
        %v463 = vmul.f32 %v462, 0.5
        %v465 = vsel %vm459, %v448, 0
        %467 = vmatprep.subr.mxu0 0.0
        %468 = vmatpush1.xpose.msra.mxu0 %v465
        %469 = vmatprep.subr.mxu0 0.0
        %470 = vmatpush1.xpose.msra.mxu0 0.0
        %471 = vmatprep.subr.mxu0 0.0
        %472 = vmatpush1.xpose.msra.mxu0 0.0
        %473 = vmatprep.subr.mxu0 0.0
        %474 = vmatpush1.xpose.msra.mxu0 0.0
        %475 = vmatprep.subr.mxu0 0.0
        %476 = vmatpush1.xpose.msra.mxu0 0.0
        %477 = vmatprep.subr.mxu0 0.0
        %478 = vmatpush1.xpose.msra.mxu0 0.0
        %479 = vmatprep.subr.mxu0 0.0
        %480 = vmatpush1.xpose.msra.mxu0 0.0
        %481 = vmatprep.subr.mxu0 0.0
        %482 = vmatpush1.xpose.msra.mxu0 0.0
        %483 = vmatprep.subr.mxu0 0.0
        %484 = vmatpush1.xpose.msra.mxu0 0.0
        %485 = vmatprep.subr.mxu0 0.0
        %486 = vmatpush1.xpose.msra.mxu0 0.0
        %487 = vmatprep.subr.mxu0 0.0
        %488 = vmatpush1.xpose.msra.mxu0 0.0
        %489 = vmatprep.subr.mxu0 0.0
        %490 = vmatpush1.xpose.msra.mxu0 0.0
        %491 = vmatprep.subr.mxu0 0.0
        %492 = vmatpush1.xpose.msra.mxu0 0.0
        %493 = vmatprep.subr.mxu0 0.0
        %494 = vmatpush1.xpose.msra.mxu0 0.0
        %495 = vmatprep.subr.mxu0 0.0
        %496 = vmatpush1.xpose.msra.mxu0 0.0
        %497 = vmatprep.subr.mxu0 0.0
        %498 = vmatpush1.xpose.msra.mxu0 0.0
        %499 = vmatprep.subr.mxu0 0.0
        %500 = vmatpush1.xpose.msra.mxu0 0.0
        %501 = vmatprep.subr.mxu0 0.0
        %502 = vmatpush1.xpose.msra.mxu0 0.0
        %503 = vmatprep.subr.mxu0 0.0
        %504 = vmatpush1.xpose.msra.mxu0 0.0
        %505 = vmatprep.subr.mxu0 0.0
        %506 = vmatpush1.xpose.msra.mxu0 0.0
        %507 = vmatprep.subr.mxu0 0.0
        %508 = vmatpush1.xpose.msra.mxu0 0.0
        %509 = vmatprep.subr.mxu0 0.0
        %510 = vmatpush1.xpose.msra.mxu0 0.0
        %511 = vmatprep.subr.mxu0 0.0
        %512 = vmatpush1.xpose.msra.mxu0 0.0
        %513 = vmatprep.subr.mxu0 0.0
        %514 = vmatpush1.xpose.msra.mxu0 0.0
        %515 = vmatprep.subr.mxu0 0.0
        %516 = vmatpush1.xpose.msra.mxu0 0.0
        %517 = vmatprep.subr.mxu0 0.0
        %518 = vmatpush1.xpose.msra.mxu0 0.0
        %519 = vmatprep.subr.mxu0 0.0
        %520 = vmatpush1.xpose.msra.mxu0 0.0
        %521 = vmatprep.subr.mxu0 0.0
        %522 = vmatpush1.xpose.msra.mxu0 0.0
        %523 = vmatprep.subr.mxu0 0.0
        %524 = vmatpush1.xpose.msra.mxu0 0.0
        %525 = vmatprep.subr.mxu0 0.0
        %526 = vmatpush1.xpose.msra.mxu0 0.0
        %527 = vmatprep.subr.mxu0 0.0
        %528 = vmatpush1.xpose.msra.mxu0 0.0
        %529 = vmatprep.subr.mxu0 0.0
        %530 = vmatpush1.xpose.msra.mxu0 0.0
        %531 = vmatprep.mubr.f32.mxu0 0.0
        %532 = vmatmul.mubr.f32.gmra.mrb[0].mxu0 %v465
        %v533 = vpop.f32.mrb[0].mxu0
        %v534 = vadd.f32 0.0, %v533
        %v535 = vpop.f32.mrb[0].mxu0
        %536 = vdwg.mxu0
        %v537 = vsub.f32 %v534, %v456
        %v539 = vlaneseq
        %v540 = vand.u32 %v539, 127
        %v541 = vlaneseq
        %v542 = vshrl.u32 %v541, 7
        %v543 = vsub.s32 %v540, %v542
        %v544 = vrot.slane %v463, %v543
        %vm545 = vcmask 1042434
        %v546 = vsel %vm545, %v544, %v544
        %vm547 = vcmask 1043459
        %v548 = vsel %vm547, %v544, %v546
        %vm549 = vcmask 1044484
        %v550 = vsel %vm549, %v544, %v548
        %vm551 = vcmask 1045509
        %v552 = vsel %vm551, %v544, %v550
        %vm553 = vcmask 1046534
        %v554 = vsel %vm553, %v544, %v552
        %vm555 = vcmask 1047559
        %v556 = vsel %vm555, %v544, %v554
        %v558 = vsub.f32 %v537, %v556
        %v559 = vmul.f32 %v558, 1.442695
        %v560 = vpow.pop %v559
        %v561 = vpack.c.bf16 %v560, %v560
        %v562 = vld [vmem:[#allocation5] sm:$0xff]
        %vm563 = vcmask 64512
        %v565 = vsel %vm563, %v561, 0
        %vm567 = vcmask 1043456
        %v569 = vsel %vm567, %v457, 0
        %571 = vmatprep.subr.bf16.mxu0 0
        %572 = vmatpush1.bf16.msra.mxu0 %v569
        %573 = vmatprep.subr.bf16.mxu0 0
        %574 = vmatpush1.bf16.msra.mxu0 0
        %575 = vmatprep.subr.bf16.mxu0 0
        %576 = vmatpush1.bf16.msra.mxu0 0
        %577 = vmatprep.subr.bf16.mxu0 0
        %578 = vmatpush1.bf16.msra.mxu0 0
        %579 = vmatprep.subr.bf16.mxu0 0
        %580 = vmatpush1.bf16.msra.mxu0 0
        %581 = vmatprep.subr.bf16.mxu0 0
        %582 = vmatpush1.bf16.msra.mxu0 0
        %583 = vmatprep.subr.bf16.mxu0 0
        %584 = vmatpush1.bf16.msra.mxu0 0
        %585 = vmatprep.subr.bf16.mxu0 0
        %586 = vmatpush1.bf16.msra.mxu0 0
        %587 = vmatprep.subr.bf16.mxu0 0
        %588 = vmatpush1.bf16.msra.mxu0 0
        %589 = vmatprep.subr.bf16.mxu0 0
        %590 = vmatpush1.bf16.msra.mxu0 0
        %591 = vmatprep.subr.bf16.mxu0 0
        %592 = vmatpush1.bf16.msra.mxu0 0
        %593 = vmatprep.subr.bf16.mxu0 0
        %594 = vmatpush1.bf16.msra.mxu0 0
        %595 = vmatprep.subr.bf16.mxu0 0
        %596 = vmatpush1.bf16.msra.mxu0 0
        %597 = vmatprep.subr.bf16.mxu0 0
        %598 = vmatpush1.bf16.msra.mxu0 0
        %599 = vmatprep.subr.bf16.mxu0 0
        %600 = vmatpush1.bf16.msra.mxu0 0
        %601 = vmatprep.subr.bf16.mxu0 0
        %602 = vmatpush1.bf16.msra.mxu0 0
        %603 = vmatprep.mubr.bf16.mxu0 0
        %604 = vmatmul.mubr.bf16.gmra.mrb[0].mxu0 %v565
        %v605 = vpop.f32.mrb[0].mxu0
        %v606 = vadd.f32 0.0, %v605
        %v607 = vpop.f32.mrb[0].mxu0
        %v608 = vpop.f32.mrb[0].mxu0
        %v609 = vpop.f32.mrb[0].mxu0
        %610 = vdwg.mxu0
        %v611 = vadd.f32 %v562, %v606
        %612 = vst.msk [vmem:[#allocation5] sm:$0xff] %vm459, %v611
        // Predicated region
        $region49: #{tpu_custom_call.1} parent=39 // pred_check
          %p613 = pneg %p300
        $region50: #{tpu_custom_call.1} parent=39 // pred_check_branch
          %615 = sbr.rel (%p613) target = $region52
        $region51: #{tpu_custom_call.1} parent=39 // pred_region
          %v616 = vld [vmem:[%s279] sm:$0xff]
          %v617 = vld [vmem:[#allocation5] sm:$0xff]
          %v618 = vpack.c.bf16 %v617, %v617
          %v619 = vld [vmem:[%s298] sm:$0xf]
          %v620 = vld [vmem:[%s298 + $0x4] sm:$0xf]
          %v623 = vunpack.c.l.b16 %v619
          %v624 = vunpack.c.l.b16 %v620
          %v625 = vpack.c.b16 %v624, %v623
          %v628 = vsel %vm459, %v618, 0
          %630 = vmatprep.subr.bf16.mxu0 0
          %631 = vmatpush1.bf16.msra.mxu0 %v625
          %632 = vmatprep.subr.bf16.mxu0 0
          %633 = vmatpush1.bf16.msra.mxu0 0
          %634 = vmatprep.subr.bf16.mxu0 0
          %635 = vmatpush1.bf16.msra.mxu0 0
          %636 = vmatprep.subr.bf16.mxu0 0
          %637 = vmatpush1.bf16.msra.mxu0 0
          %638 = vmatprep.subr.bf16.mxu0 0
          %639 = vmatpush1.bf16.msra.mxu0 0
          %640 = vmatprep.subr.bf16.mxu0 0
          %641 = vmatpush1.bf16.msra.mxu0 0
          %642 = vmatprep.subr.bf16.mxu0 0
          %643 = vmatpush1.bf16.msra.mxu0 0
          %644 = vmatprep.subr.bf16.mxu0 0
          %645 = vmatpush1.bf16.msra.mxu0 0
          %646 = vmatprep.subr.bf16.mxu0 0
          %647 = vmatpush1.bf16.msra.mxu0 0
          %648 = vmatprep.subr.bf16.mxu0 0
          %649 = vmatpush1.bf16.msra.mxu0 0
          %650 = vmatprep.subr.bf16.mxu0 0
          %651 = vmatpush1.bf16.msra.mxu0 0
          %652 = vmatprep.subr.bf16.mxu0 0
          %653 = vmatpush1.bf16.msra.mxu0 0
          %654 = vmatprep.subr.bf16.mxu0 0
          %655 = vmatpush1.bf16.msra.mxu0 0
          %656 = vmatprep.subr.bf16.mxu0 0
          %657 = vmatpush1.bf16.msra.mxu0 0
          %658 = vmatprep.subr.bf16.mxu0 0
          %659 = vmatpush1.bf16.msra.mxu0 0
          %660 = vmatprep.subr.bf16.mxu0 0
          %661 = vmatpush1.bf16.msra.mxu0 0
          %662 = vmatprep.mubr.bf16.mxu0 0
          %663 = vmatmul.mubr.bf16.gmra.mrb[0].mxu0 %v628
          %v664 = vpop.f32.mrb[0].mxu0
          %v665 = vadd.f32 0.0, %v664
          %v666 = vpop.f32.mrb[0].mxu0
          %v667 = vpop.f32.mrb[0].mxu0
          %v668 = vpop.f32.mrb[0].mxu0
          %669 = vdwg.mxu0
          %v670 = vadd.f32 %v616, %v665
          %671 = vst [vmem:[%s279] sm:$0xff] %v670
        $region52: #{tpu_custom_call.1} parent=39 // pred_fallthru
          _
        %p672 = scmp.eq.s32.totalorder %s25, 1
        %p673 = pnand %p672, %p300
        %p674 = pneg %p673
        // Predicated region
        $region53: #{tpu_custom_call.1} parent=39 // pred_check
          _
        $region54: #{tpu_custom_call.1} parent=39 // pred_check_branch
          %676 = sbr.rel (%p673) target = $region56
        $region55: #{tpu_custom_call.1} parent=39 // pred_region
          %v677 = vld [vmem:[%s279] sm:$0xff]
          %v678 = vld [vmem:[%s4] sm:$0x1]
          %v680 = vlaneseq
          %v681 = vshrl.u32 %v680, 7
          %v682 = vsub.s32 0, %v681
          %v683 = vrot.slane %v678, %v682
          %v685 = vadd.f32 %v677, %v683
          %686 = vst [vmem:[%s279] sm:$0xff] %v685
        $region56: #{tpu_custom_call.1} parent=39 // pred_fallthru
          _
        %s687 = sand.u32 %s171, 1
        %s688 = scalar_lea.sflag [#allocation7], %s687
        %s689 = sand.u32 %s171, 1
        %s690 = smul.addr %s689, 8
        %s691 = scalar_lea.vmem [#allocation6], %s690
        // Predicated region
        $region57: #{tpu_custom_call.1} parent=39 // pred_check
          %p692 = pneg %p181
        $region58: #{tpu_custom_call.1} parent=39 // pred_check_branch
          %694 = sbr.rel (%p692) target = $region60
        $region59: #{tpu_custom_call.1} parent=39 // pred_region
          %s696 = ssub.s32 128, 128
          %697 = vsyncadd %s688, %s696
          %s698 = smul.addr %s24, 128
          %s699 = scalar_lea.hbm %s5, %s698
          %s701 = sshll.u32 %s691, 4
          %s702 = int_to_ptr.vmem [resolvable:$true] %s701
          %704 = dma.vmem_to_hbm [thread:$0]  %s702, 128, %s699, %s688
        $region60: #{tpu_custom_call.1} parent=39 // pred_fallthru
          _
      $region40: #{tpu_custom_call.1} parent=5 // pred_fallthru
        _
      %p705 = scmp.le.s32.totalorder 2, %s14
      // Predicated region
      $region61: #{tpu_custom_call.1} parent=5 // pred_check
        %p706 = pneg %p705
      $region62: #{tpu_custom_call.1} parent=5 // pred_check_branch
        %708 = sbr.rel (%p706) target = $region64
      $region63: #{tpu_custom_call.1} parent=5 // pred_region
        %s709 = ssub.s32 %s14, 2
        // Predicated region
        $region65: #{tpu_custom_call.1} parent=63 // pred_check
          %p710 = pneg %p187
        $region66: #{tpu_custom_call.1} parent=63 // pred_check_branch
          %712 = sbr.rel (%p710) target = $region68
        $region67: #{tpu_custom_call.1} parent=63 // pred_region
          %s713 = sand.u32 %s172, 1
          %s714 = scalar_lea.sflag [#allocation7], %s713
          %s715 = sand.u32 %s172, 1
          %s716 = smul.addr %s715, 8
          %s717 = scalar_lea.vmem [#allocation6], %s716
          %718 = dma.done %s714, 128
        $region68: #{tpu_custom_call.1} parent=63 // pred_fallthru
          _
      $region64: #{tpu_custom_call.1} parent=5 // pred_fallthru
        _
    $region6: #{tpu_custom_call.1} parent=1 // loop_footer
      %s18 = sadd.s32 1, %s14
    $region7: #{tpu_custom_call.1} parent=1 // loop_footer_branch
      %13 = sbr.rel target = $region3
    $region8: #{tpu_custom_call.1} parent=1 // loop_exit
      _
    %719 = vsyncpa [#allocation7], 1
    %s720 = scalar_lea.sflag [#allocation7], 1
    %721 = vsyncpa %s720, 1

</llo_original>
